<compile_context>
chip_gen: v7x
topology: tpu7x:2x2x1
jax: 0.10.0
libtpu: 0.0.40
codegen_flags: <defaults>
</compile_context>

<pallas_src>
import functools

import jax
import jax.numpy as jnp
from jax.experimental import pallas as pl
from jax.experimental.pallas import tpu as pltpu


def _round_up(x: int, m: int) -> int:
    return ((x + m - 1) // m) * m


def _vmem_config():
    """Return (tile_working_set_budget, scoped_vmem_limit, row_cap), per chip gen."""
    try:
        cap = int(getattr(pltpu.get_tpu_info(), "vmem_capacity_bytes", 64 * 2**20))
    except Exception:  # pragma: no cover - conservative fallback
        cap = 64 * 2**20
    if cap > 96 * 2**20:
        # v5e / v6e: 128 MiB physical VMEM -> bigger tiles amortize the
        # ~0.35 us per-grid-step overhead and feed the DMA pipeline.
        return 40 * 2**20, 80 * 2**20, 4096
    # v7x-class: 64 MiB per TensorCore -> keep headroom for the 2-deep
    # input pipeline; never request the whole VMEM as scoped limit.
    return 16 * 2**20, 44 * 2**20, 1024


def _choose_tile_n(n: int, c: int, budget_bytes: int, row_cap: int) -> int:
    """Biggest batch tile whose working set fits the per-generation budget."""
    # ~24 B/elem: 2x input double-buffer (<=8 B) + d, exp(d), w*d f32 temps.
    bytes_per_row = 24 * c
    rows = max(8, (budget_bytes // max(bytes_per_row, 1)) // 8 * 8)
    rows = min(rows, row_cap)
    # Give both v7x TensorCores grid work when the batch is big enough.
    if n >= 16:
        rows = min(rows, _round_up(pl.cdiv(n, 2), 8))
    return min(rows, _round_up(n, 8))


def _ls_ce_kernel(x_ref, tgt_ref, partial_ref, *, smoothing: float,
                  n_total: int, tile_n: int):
    """One batch tile: fused logsumexp + weighted row reduction, masked sum."""
    confidence = 1.0 - smoothing
    i = pl.program_id(0)

    x = x_ref[...].astype(jnp.float32)            # (TILE_N, C); f32 math
    tgt = tgt_ref[...]                            # (TILE_N, 1) int32
    tn, c = x.shape

    # Single shifted copy d = x - m, reused by exp and the weighted sum
    # (the row max m cancels because the weights below sum to 1).
    m = jnp.max(x, axis=-1, keepdims=True)                             # (TILE_N, 1)
    d = x - m                                                          # (TILE_N, C)
    s = jnp.sum(jnp.exp(d), axis=-1, keepdims=True)                    # (TILE_N, 1)

    # Fused target-gather + class-mean:
    #   w_c = smoothing/C + confidence * (c == tgt),  sum_c w_c == 1
    #   loss = lse - sum_c(w_c * x_c) = log(sum_c exp(d_c)) - sum_c(w_c * d_c)
    base_w = jnp.float32(smoothing / c)
    hit_w = jnp.float32(smoothing / c + confidence)
    col_ids = jax.lax.broadcasted_iota(jnp.int32, (tn, c), 1)          # (TILE_N, C)
    wsum = jnp.sum(jnp.where(col_ids == tgt, hit_w, base_w) * d,
                   axis=-1, keepdims=True)                             # (TILE_N, 1)

    loss = jnp.log(s) - wsum                                           # (TILE_N, 1)

    # Mask rows beyond the true batch size (last partial tile).  Must stay a
    # `where`: padded rows hold unspecified data and may be Inf/NaN.
    row_ids = jax.lax.broadcasted_iota(jnp.int32, (tn, 1), 0) + i * tile_n
    loss = jnp.where(row_ids < n_total, loss, 0.0)

    partial_ref[0, 0] = jnp.sum(loss)


def label_smoothing_cross_entropy(x, target, smoothing: float = 0.1):
    """x: (N, C) float logits (f32 or bf16), target: (N,) int ids in [0, C) -> scalar f32."""
    n, c = x.shape
    tgt2d = target.astype(jnp.int32).reshape(n, 1)

    budget, vmem_limit, row_cap = _vmem_config()
    tile_n = _choose_tile_n(n, c, budget, row_cap)
    num_tiles = pl.cdiv(n, tile_n)

    cost = pl.CostEstimate(
        flops=8 * n * c,
        transcendentals=n * c,
        bytes_accessed=n * c * x.dtype.itemsize + 4 * n + 4 * num_tiles,
    )

    partials = pl.pallas_call(
        functools.partial(_ls_ce_kernel, smoothing=float(smoothing),
                          n_total=n, tile_n=tile_n),
        out_shape=jax.ShapeDtypeStruct((num_tiles, 1), jnp.float32),
        grid=(num_tiles,),
        in_specs=[
            pl.BlockSpec((tile_n, c), lambda i: (i, 0)),
            pl.BlockSpec((tile_n, 1), lambda i: (i, 0)),
        ],
        out_specs=pl.BlockSpec((1, 1), lambda i: (i, 0),
                               memory_space=pltpu.SMEM),
        compiler_params=pltpu.CompilerParams(
            dimension_semantics=("parallel",),
            vmem_limit_bytes=int(vmem_limit),
        ),
        cost_estimate=cost,
    )(x, tgt2d)

    # Tiny reduction of per-tile partial sums; divide by the true batch size.
    return jnp.sum(partials) / jnp.float32(n)


def _reference(x, target, smoothing: float = 0.1):
    """Pure-JAX reference mirroring the PyTorch module."""
    confidence = 1.0 - smoothing
    logprobs = jax.nn.log_softmax(x.astype(jnp.float32), axis=-1)
    nll = -jnp.take_along_axis(logprobs, target[:, None], axis=-1)[:, 0]
    smooth = -jnp.mean(logprobs, axis=-1)
    return jnp.mean(confidence * nll + smoothing * smooth)


if __name__ == "__main__":
    key = jax.random.PRNGKey(0)
    kx, kt = jax.random.split(key)

    N, C = 8, 128  # batch of 8 examples, 128 classes
    x = jax.random.normal(kx, (N, C), dtype=jnp.float32)
    target = jax.random.randint(kt, (N,), 0, C, dtype=jnp.int32)

    loss = label_smoothing_cross_entropy(x, target, smoothing=0.1)
    loss = jax.block_until_ready(loss)

    ref = _reference(x, target, smoothing=0.1)
    assert jnp.allclose(loss, ref, atol=1e-5, rtol=1e-5), (loss, ref)

    print("KERNEL_OK")
</pallas_src>

<mosaic_0001>
module attributes {stable_mosaic.version = 11 : i64} {
  func.func @_ls_ce_kernel(%arg0: i32, %arg1: memref<8x128xf32, #tpu.memory_space<vmem>>, %arg2: memref<8x1xi32, #tpu.memory_space<vmem>>, %arg3: memref<1x1xf32, #tpu.memory_space<smem>>) attributes {dimension_semantics = [#tpu.dimension_semantics<parallel>], iteration_bounds = array<i64: 1>, scalar_prefetch = 0 : i64, scratch_operands = 0 : i64, tpu.core_type = #tpu.core_type<tc>, window_params = [{transform_indices = @transform_0, window_bounds = array<i64: 8, 128>}, {transform_indices = @transform_1, window_bounds = array<i64: 8, 1>}, {transform_indices = @transform_2, window_bounds = array<i64: 1, 1>}]} {
    %c0 = arith.constant 0 : index
    %c0_0 = arith.constant 0 : index
    %0 = vector.load %arg1[%c0, %c0_0] : memref<8x128xf32, #tpu.memory_space<vmem>>, vector<8x128xf32>
    %c0_1 = arith.constant 0 : index
    %c0_2 = arith.constant 0 : index
    %1 = vector.load %arg2[%c0_1, %c0_2] : memref<8x1xi32, #tpu.memory_space<vmem>>, vector<8x1xi32>
    %cst = arith.constant dense<0xFF800000> : vector<8xf32>
    %2 = vector.multi_reduction <maximumf>, %0, %cst [1] : vector<8x128xf32> to vector<8xf32>
    %3 = vector.shape_cast %2 : vector<8xf32> to vector<8x1xf32>
    %4 = vector.broadcast %3 : vector<8x1xf32> to vector<8x128xf32>
    %5 = arith.subf %0, %4 : vector<8x128xf32>
    %6 = math.exp %5 : vector<8x128xf32>
    %cst_3 = arith.constant dense<0.000000e+00> : vector<8xf32>
    %7 = vector.multi_reduction <add>, %6, %cst_3 [1] : vector<8x128xf32> to vector<8xf32>
    %8 = vector.shape_cast %7 : vector<8xf32> to vector<8x1xf32>
    %9 = tpu.iota {dimensions = array<i32: 1>} : vector<8x128xi32>
    %10 = vector.broadcast %1 : vector<8x1xi32> to vector<8x128xi32>
    %11 = arith.cmpi eq, %9, %10 : vector<8x128xi32>
    %cst_4 = arith.constant 0.900781273 : f32
    %cst_5 = arith.constant 7.812500e-04 : f32
    %12 = vector.broadcast %cst_4 : f32 to vector<8x128xf32>
    %13 = vector.broadcast %cst_5 : f32 to vector<8x128xf32>
    %14 = arith.select %11, %12, %13 : vector<8x128xi1>, vector<8x128xf32>
    %15 = arith.mulf %14, %5 : vector<8x128xf32>
    %cst_6 = arith.constant dense<0.000000e+00> : vector<8xf32>
    %16 = vector.multi_reduction <add>, %15, %cst_6 [1] : vector<8x128xf32> to vector<8xf32>
    %17 = vector.shape_cast %16 : vector<8xf32> to vector<8x1xf32>
    %18 = math.log %8 : vector<8x1xf32>
    %19 = arith.subf %18, %17 : vector<8x1xf32>
    %20 = tpu.iota {dimensions = array<i32: 0>} : vector<8x1xi32>
    %c8_i32 = arith.constant 8 : i32
    %21 = arith.muli %arg0, %c8_i32 : i32
    %22 = vector.broadcast %21 : i32 to vector<8x1xi32>
    %23 = arith.addi %20, %22 : vector<8x1xi32>
    %c8_i32_7 = arith.constant 8 : i32
    %24 = vector.broadcast %c8_i32_7 : i32 to vector<8x1xi32>
    %25 = arith.cmpi slt, %23, %24 : vector<8x1xi32>
    %cst_8 = arith.constant 0.000000e+00 : f32
    %26 = vector.broadcast %cst_8 : f32 to vector<8x1xf32>
    %27 = arith.select %25, %19, %26 : vector<8x1xi1>, vector<8x1xf32>
    %28 = vector.shape_cast %27 : vector<8x1xf32> to vector<1x8x1xf32>
    %cst_9 = arith.constant dense<0.000000e+00> : vector<1xf32>
    %29 = vector.multi_reduction <add>, %28, %cst_9 [1, 2] : vector<1x8x1xf32> to vector<1xf32>
    %30 = vector.shape_cast %29 : vector<1xf32> to vector<1x1x1xf32>
    %31 = vector.extract %30[0, 0, 0] : f32 from vector<1x1x1xf32>
    %c0_10 = arith.constant 0 : index
    %c0_11 = arith.constant 0 : index
    %32 = memref.load %arg3[%c0_10, %c0_11] : memref<1x1xf32, #tpu.memory_space<smem>>
    memref.store %31, %arg3[%c0_10, %c0_11] : memref<1x1xf32, #tpu.memory_space<smem>>
    return
  }
  func.func @transform_0(%arg0: i32) -> (i32, i32) {
    %c0_i32 = arith.constant 0 : i32
    %c0_i32_0 = arith.constant 0 : i32
    return %arg0, %c0_i32 : i32, i32
  }
  func.func @transform_1(%arg0: i32) -> (i32, i32) {
    %c0_i32 = arith.constant 0 : i32
    %c0_i32_0 = arith.constant 0 : i32
    return %arg0, %c0_i32 : i32, i32
  }
  func.func @transform_2(%arg0: i32) -> (i32, i32) {
    %c0_i32 = arith.constant 0 : i32
    %c0_i32_0 = arith.constant 0 : i32
    return %arg0, %c0_i32 : i32, i32
  }
}

</mosaic_0001>

<llo_original>
// kernel: tpu_custom_call.1
$region0: #{tpu_custom_call.1}
  #allocation0 [shape = 'u32[]', space=smem, size = 0x4, offset = 0x4, fixed_abs, tag = 'smem constant byte address 0x4 - core index']
  #allocation1 [shape = 'u32[144,128]{1,0:T(1,128)}', space=vmem, size = 0x12000, scoped, tag = 'internal scratch']
  %s0 = inlined_call_operand.vmem [shape: f32[8,128], index: 0, kind: input, shape index: {}]
  %s1 = inlined_call_operand.vmem [shape: s32[8,1], index: 1, kind: input, shape index: {}]
  %s2 = inlined_call_operand.hbm [shape: f32[1,1], index: 2, kind: output, shape index: {}]
  %s3 = sld [smem:[#allocation0]]
  $region18: #{tpu_custom_call.1} parent=0
    _
  %s5 = ssub.s32 1, %s3
  %s6 = scalar_select 0, %s5, %s3
  $region1: #{tpu_custom_call.1} parent=0
    #allocation2 [shape = 'u8[512]{0}', space=smem, size = 0x200, scoped, tag = 'output window, operand 0, single buffered']
    #allocation3 [shape = 's32[1]{0}', space=sflag, size = 0x4, scoped, tag = 'scoped memory for tpu_custom_call.1']
    %7 = vsyncpa [#allocation3], 0
    // Predicated region
    $region2: #{tpu_custom_call.1} parent=1 // pred_check
      _
    $region3: #{tpu_custom_call.1} parent=1 // pred_check_branch
      %9 = sbr.rel (0) target = $region5
    $region4: #{tpu_custom_call.1} parent=1 // pred_region
      _
    $region5: #{tpu_custom_call.1} parent=1 // pred_fallthru
      _
    // Predicated region
    $region6: #{tpu_custom_call.1} parent=1 // pred_check
      _
    $region7: #{tpu_custom_call.1} parent=1 // pred_check_branch
      %11 = sbr.rel (0) target = $region9
    $region8: #{tpu_custom_call.1} parent=1 // pred_region
      _
    $region9: #{tpu_custom_call.1} parent=1 // pred_fallthru
      _
    %v12 = vld [vmem:[%s0] sm:$0xff]
    %v13 = vld [vmem:[%s1] sm:$0xff]
    %14 = vmax.xlane.f32.xlu0 %v12
    %v15 = vpop.xlane.xlu0 %14
    %v16 = vsub.f32 %v12, %v15
    %v17 = vmul.f32 %v16, 1.442695
    %v18 = vpow.pop %v17
    %19 = vadd.xlane.f32.xlu0 %v18
    %v20 = vpop.xlane.xlu0 %19
    %v21 = vlaneseq
    %v22 = vand.u32 %v21, 127
    %23 = vset.pattern.permute.xlu0 0
    %24 = vperm.xlu0 %23, %v13
    %v25 = vpop.permute.xlu0 %24
    %vm26 = vcmp.eq.s32.totalorder %v22, %v25
    %v27 = vsel %vm26, 0.9007813, 0.00078125
    %v28 = vmul.f32 %v27, %v16
    %29 = vadd.xlane.f32.xlu0 %v28
    %v30 = vpop.xlane.xlu0 %29
    %v31 = vlog2.pop %v20
    %v32 = vmul.f32 %v31, 0.6931472
    %v33 = vsub.f32 %v32, %v30
    %v34 = vlaneseq
    %v35 = vshrl.u32 %v34, 7
    %s36 = smul.u32 0, 8
    %v37 = vstv %s36
    %v38 = vadd.s32 %v35, %v37
    %vm39 = vcmp.lt.s32.totalorder %v38, 8
    %v40 = vsel %vm39, %v33, 0.0
    %vm41 = vcmask 7168
    %v42 = vsel %vm41, %v40, 0.0
    %43 = vadd.xlane.f32.xlu0 %v42
    %v44 = vpop.xlane.xlu0 %43
    %v45 = vrot.slane %v44, 4
    %v46 = vadd.f32 %v44, %v45
    %v47 = vrot.slane %v46, 2
    %v48 = vadd.f32 %v46, %v47
    %v49 = vrot.slane %v48, 1
    %v50 = vadd.f32 %v48, %v49
    %s51 = vtos %v50
    %s52 = scalar_lea.smem [#allocation2], 0
    %53 = sst [smem:[%s52]] %s51
    // Predicated region
    $region10: #{tpu_custom_call.1} parent=1 // pred_check
      _
    $region11: #{tpu_custom_call.1} parent=1 // pred_check_branch
      %55 = sbr.rel (0) target = $region13
    $region12: #{tpu_custom_call.1} parent=1 // pred_region
      %s57 = ssub.s32 16, 16
      %58 = vsyncadd [#allocation3], %s57
      %61 = dma.smem_to_hbm [#allocation2], 16, %s2, [#allocation3]
    $region13: #{tpu_custom_call.1} parent=1 // pred_fallthru
      _
    // Predicated region
    $region14: #{tpu_custom_call.1} parent=1 // pred_check
      _
    $region15: #{tpu_custom_call.1} parent=1 // pred_check_branch
      %63 = sbr.rel (0) target = $region17
    $region16: #{tpu_custom_call.1} parent=1 // pred_region
      %64 = dma.done [#allocation3], 16
    $region17: #{tpu_custom_call.1} parent=1 // pred_fallthru
      _
    %65 = sfence
    %66 = vsyncpa [#allocation3], 1

</llo_original>
